<compile_context>
chip_gen: v7x
topology: tpu7x:2x2x1
jax: 0.10.0
libtpu: 0.0.40
codegen_flags: <defaults>
</compile_context>

<pallas_src>
import jax
import jax.numpy as jnp
from jax.experimental import pallas as pl
from jax.experimental.pallas import tpu as pltpu


def _pick_col_tile(n_rows, n_cols, itemsize, requested):
    """Column tile width: multiple of 128 dividing n_cols, sized to a VMEM budget."""
    if requested is not None:
        if n_cols % requested != 0:
            raise ValueError(f"tn={requested} must divide the weight width n={n_cols}")
        return requested
    if n_cols % 128 != 0:
        # Tiny / odd widths (e.g. a toy N=32 case): single full-width tile.
        return n_cols
    # Double-buffered W + B column slabs: 2 arrays x 2 buffers x (n_rows, tile).
    budget_bytes = 24 * 1024 * 1024
    per_col_bytes = 2 * 2 * n_rows * itemsize
    max_cols = max(128, (budget_bytes // max(per_col_bytes, 1)) // 128 * 128)
    t = min(max_cols, n_cols, 1024)
    while n_cols % t:
        t -= 128
    return max(t, 128)


def _relora_col_tile_kernel(scale_ref, a_ref, la_ref, lb_ref, w_ref, b_ref, out_ref):
    """One column tile of the ReLoRa loss.

    Shapes seen by the kernel (TN = column tile width):
      scale_ref : (1,)      SMEM f32
      a_ref     : (M, N)    activations (full, resident)
      la_ref    : (N, r)    lora_A.weight (full, resident)
      lb_ref    : (r, TN)   lora_B.weight column tile
      w_ref     : (N, TN)   W column tile
      b_ref     : (N, TN)   B column tile
      out_ref   : (1, TN)   per-column partial loss (f32, lane-dense)
    """
    f32 = jnp.float32
    scale = scale_ref[0]

    # LoRA delta for this column tile: (N, r) @ (r, TN) on the MXU, f32 acc.
    delta = jnp.dot(la_ref[...], lb_ref[...], preferred_element_type=f32)

    # Effective weight tile.  Elementwise math stays in f32 even for bf16 inputs.
    w_eff = w_ref[...].astype(f32) - scale * delta

    # tmp tile = A @ w_eff_tile : (M, N) @ (N, TN) -> (M, TN), f32 acc on MXU.
    tmp = jnp.dot(a_ref[...], w_eff.astype(a_ref.dtype), preferred_element_type=f32)

    bw = b_ref[...].astype(f32) * w_eff

    # Row (sublane) reductions only -> lane-dense (1, TN) partial row.
    out_ref[...] = (
        0.5 * jnp.sum(tmp * tmp, axis=0, keepdims=True)
        + jnp.sum(bw, axis=0, keepdims=True)
    )


def make_relora_forward(scale=1.0, *, tn=None, compute_dtype=jnp.bfloat16):
    """Returns a jitted function computing the ReLoRaLinear forward loss.

    compute_dtype: dtype the five input arrays are cast to at the call boundary
    (bf16 halves HBM traffic; all accumulation remains f32).
    """

    def forward(w, lora_a_w, lora_b_w, a, b, scale_value=scale):
        n_out, n_in = w.shape                  # PyTorch layout: (out_features, in_features)
        m = a.shape[0]
        r = lora_a_w.shape[1]
        itemsize = jnp.dtype(compute_dtype).itemsize
        col_tile = _pick_col_tile(n_out, n_in, itemsize, tn)
        grid = (n_in // col_tile,)

        scale_arr = jnp.asarray(scale_value, jnp.float32).reshape(1)
        w_c = w.astype(compute_dtype)
        la_c = lora_a_w.astype(compute_dtype)
        lb_c = lora_b_w.astype(compute_dtype)
        a_c = a.astype(compute_dtype)
        b_c = b.astype(compute_dtype)

        partials = pl.pallas_call(
            _relora_col_tile_kernel,
            out_shape=jax.ShapeDtypeStruct((1, n_in), jnp.float32),
            grid=grid,
            in_specs=[
                # scale: whole (1,) scalar in SMEM (no recompile per scale value).
                pl.BlockSpec(memory_space=pltpu.MemorySpace.SMEM),
                # A and lora_A stay fully resident (small, constant index_map).
                pl.BlockSpec((m, n_in), lambda j: (0, 0)),
                pl.BlockSpec((n_out, r), lambda j: (0, 0)),
                # Column-tiled operands (pipelined / double-buffered by Pallas).
                pl.BlockSpec((r, col_tile), lambda j: (0, j)),
                pl.BlockSpec((n_out, col_tile), lambda j: (0, j)),
                pl.BlockSpec((n_out, col_tile), lambda j: (0, j)),
            ],
            out_specs=pl.BlockSpec((1, col_tile), lambda j: (0, j)),
            compiler_params=pltpu.CompilerParams(
                dimension_semantics=("parallel",),
                vmem_limit_bytes=48 * 1024 * 1024,
            ),
        )(scale_arr, a_c, la_c, lb_c, w_c, b_c)

        # Final scalar reduction of the lane-dense per-column partials.
        return jnp.sum(partials)

    return jax.jit(forward)


def relora_reference(w, lora_a_w, lora_b_w, a, b, scale, compute_dtype=jnp.float32):
    """Pure-JAX reference mirroring the kernel's cast chain."""
    f32 = jnp.float32
    hp = jax.lax.Precision.HIGHEST
    w_c = w.astype(compute_dtype)
    la_c = lora_a_w.astype(compute_dtype)
    lb_c = lora_b_w.astype(compute_dtype)
    a_c = a.astype(compute_dtype)
    b_c = b.astype(compute_dtype)
    delta = jnp.dot(la_c, lb_c, preferred_element_type=f32, precision=hp)
    w_eff = w_c.astype(f32) - jnp.float32(scale) * delta
    tmp = jnp.dot(a_c, w_eff.astype(compute_dtype), preferred_element_type=f32, precision=hp)
    return 0.5 * jnp.sum(tmp * tmp) + jnp.sum(b_c.astype(f32) * w_eff)


if __name__ == "__main__":
    # Small shapes consistent with the module (square weight, LoRA rank r),
    # but wide enough (multiple 128-lane column tiles) to exercise the tiled path.
    N = 256    # in_features == out_features (model.X.shape[0])
    M = 8      # rows of activation A
    r = 8      # LoRA rank (module default is 128; small for the test)
    scale = 0.5
    TN = 128   # column tile -> grid of 2 tiles

    key = jax.random.PRNGKey(0)
    k_w, k_la, k_lb, k_a, k_b = jax.random.split(key, 5)

    # NOTE: PyTorch __init__ zero-inits lora_A / lora_B; we use small random
    # values so the full compute path (LoRA delta matmul) is exercised.
    w = jax.random.normal(k_w, (N, N), dtype=jnp.float32)           # self.weight (out, in)
    lora_a_w = 0.1 * jax.random.normal(k_la, (N, r), jnp.float32)   # lora_A.weight
    lora_b_w = 0.1 * jax.random.normal(k_lb, (r, N), jnp.float32)   # lora_B.weight
    a_in = jax.random.normal(k_a, (M, N), dtype=jnp.float32)
    b_in = jax.random.normal(k_b, (N, N), dtype=jnp.float32)

    # Check both the f32 path and the bandwidth-optimized bf16 path, with both
    # the explicit-tile and the auto-tile code paths.
    for dtype, rtol in ((jnp.float32, 5e-3), (jnp.bfloat16, 1e-2)):
        for tile in (TN, None):
            fwd = make_relora_forward(scale, tn=tile, compute_dtype=dtype)
            out = jax.block_until_ready(fwd(w, lora_a_w, lora_b_w, a_in, b_in))
            ref = relora_reference(w, lora_a_w, lora_b_w, a_in, b_in, scale, dtype)
            assert jnp.allclose(out, ref, rtol=rtol, atol=1e-2), (dtype, tile, out, ref)

    print("KERNEL_OK")
</pallas_src>

<mosaic_0001>
module attributes {stable_mosaic.version = 11 : i64} {
  func.func @_relora_col_tile_kernel(%arg0: i32, %arg1: memref<1xf32, #tpu.memory_space<smem>>, %arg2: memref<8x256xf32, #tpu.memory_space<vmem>>, %arg3: memref<256x8xf32, #tpu.memory_space<vmem>>, %arg4: memref<8x128xf32, #tpu.memory_space<vmem>>, %arg5: memref<256x128xf32, #tpu.memory_space<vmem>>, %arg6: memref<256x128xf32, #tpu.memory_space<vmem>>, %arg7: memref<1x128xf32, #tpu.memory_space<vmem>>) attributes {dimension_semantics = [#tpu.dimension_semantics<parallel>], iteration_bounds = array<i64: 2>, scalar_prefetch = 0 : i64, scratch_operands = 0 : i64, tpu.core_type = #tpu.core_type<tc>, window_params = [{transform_indices = @transform_0, window_bounds = array<i64: 1>}, {pipeline_mode = #tpu.pipeline_mode<synchronous>, transform_indices = @transform_1, window_bounds = array<i64: 8, 256>}, {pipeline_mode = #tpu.pipeline_mode<synchronous>, transform_indices = @transform_2, window_bounds = array<i64: 256, 8>}, {transform_indices = @transform_3, window_bounds = array<i64: 8, 128>}, {transform_indices = @transform_4, window_bounds = array<i64: 256, 128>}, {transform_indices = @transform_5, window_bounds = array<i64: 256, 128>}, {transform_indices = @transform_6, window_bounds = array<i64: 1, 128>}]} {
    %c0 = arith.constant 0 : index
    %0 = memref.load %arg1[%c0] : memref<1xf32, #tpu.memory_space<smem>>
    %c0_0 = arith.constant 0 : index
    %c0_1 = arith.constant 0 : index
    %1 = vector.load %arg3[%c0_0, %c0_1] : memref<256x8xf32, #tpu.memory_space<vmem>>, vector<256x8xf32>
    %c0_2 = arith.constant 0 : index
    %c0_3 = arith.constant 0 : index
    %2 = vector.load %arg4[%c0_2, %c0_3] : memref<8x128xf32, #tpu.memory_space<vmem>>, vector<8x128xf32>
    %cst = arith.constant dense<0.000000e+00> : vector<256x128xf32>
    %3 = tpu.matmul %1, %2, %cst {dimension_numbers = #tpu.dot_dimension_numbers<[1], [0], [0], [1], [0, 0, 1, 1], [], []>} : vector<256x8xf32>, vector<8x128xf32>, vector<256x128xf32> -> vector<256x128xf32>
    %c0_4 = arith.constant 0 : index
    %c0_5 = arith.constant 0 : index
    %4 = vector.load %arg5[%c0_4, %c0_5] : memref<256x128xf32, #tpu.memory_space<vmem>>, vector<256x128xf32>
    %5 = vector.broadcast %0 : f32 to vector<256x128xf32>
    %6 = arith.mulf %5, %3 : vector<256x128xf32>
    %7 = arith.subf %4, %6 : vector<256x128xf32>
    %c0_6 = arith.constant 0 : index
    %c0_7 = arith.constant 0 : index
    %8 = vector.load %arg2[%c0_6, %c0_7] : memref<8x256xf32, #tpu.memory_space<vmem>>, vector<8x256xf32>
    %cst_8 = arith.constant dense<0.000000e+00> : vector<8x128xf32>
    %9 = tpu.matmul %8, %7, %cst_8 {dimension_numbers = #tpu.dot_dimension_numbers<[1], [0], [0], [1], [0, 0, 1, 1], [], []>} : vector<8x256xf32>, vector<256x128xf32>, vector<8x128xf32> -> vector<8x128xf32>
    %c0_9 = arith.constant 0 : index
    %c0_10 = arith.constant 0 : index
    %10 = vector.load %arg6[%c0_9, %c0_10] : memref<256x128xf32, #tpu.memory_space<vmem>>, vector<256x128xf32>
    %11 = arith.mulf %10, %7 : vector<256x128xf32>
    %12 = arith.mulf %9, %9 : vector<8x128xf32>
    %cst_11 = arith.constant dense<0.000000e+00> : vector<128xf32>
    %13 = vector.multi_reduction <add>, %12, %cst_11 [0] : vector<8x128xf32> to vector<128xf32>
    %14 = vector.shape_cast %13 : vector<128xf32> to vector<1x128xf32>
    %cst_12 = arith.constant 5.000000e-01 : f32
    %15 = vector.broadcast %cst_12 : f32 to vector<1x128xf32>
    %16 = arith.mulf %15, %14 : vector<1x128xf32>
    %cst_13 = arith.constant dense<0.000000e+00> : vector<128xf32>
    %17 = vector.multi_reduction <add>, %11, %cst_13 [0] : vector<256x128xf32> to vector<128xf32>
    %18 = vector.shape_cast %17 : vector<128xf32> to vector<1x128xf32>
    %19 = arith.addf %16, %18 : vector<1x128xf32>
    %c0_14 = arith.constant 0 : index
    %c0_15 = arith.constant 0 : index
    %20 = vector.load %arg7[%c0_14, %c0_15] : memref<1x128xf32, #tpu.memory_space<vmem>>, vector<1x128xf32>
    tpu.vector_store %arg7[%c0_14, %c0_15], %19 {strides = array<i32>} : memref<1x128xf32, #tpu.memory_space<vmem>>, vector<1x128xf32>,
    return
  }
  func.func @transform_0(%arg0: i32) -> i32 {
    %c0_i32 = arith.constant 0 : i32
    %c0_i32_0 = arith.constant 0 : i32
    return %c0_i32 : i32
  }
  func.func @transform_1(%arg0: i32) -> (i32, i32) {
    %c0_i32 = arith.constant 0 : i32
    %c0_i32_0 = arith.constant 0 : i32
    %c0_i32_1 = arith.constant 0 : i32
    return %c0_i32, %c0_i32_0 : i32, i32
  }
  func.func @transform_2(%arg0: i32) -> (i32, i32) {
    %c0_i32 = arith.constant 0 : i32
    %c0_i32_0 = arith.constant 0 : i32
    %c0_i32_1 = arith.constant 0 : i32
    return %c0_i32, %c0_i32_0 : i32, i32
  }
  func.func @transform_3(%arg0: i32) -> (i32, i32) {
    %c0_i32 = arith.constant 0 : i32
    %c0_i32_0 = arith.constant 0 : i32
    return %c0_i32, %arg0 : i32, i32
  }
  func.func @transform_4(%arg0: i32) -> (i32, i32) {
    %c0_i32 = arith.constant 0 : i32
    %c0_i32_0 = arith.constant 0 : i32
    return %c0_i32, %arg0 : i32, i32
  }
  func.func @transform_5(%arg0: i32) -> (i32, i32) {
    %c0_i32 = arith.constant 0 : i32
    %c0_i32_0 = arith.constant 0 : i32
    return %c0_i32, %arg0 : i32, i32
  }
  func.func @transform_6(%arg0: i32) -> (i32, i32) {
    %c0_i32 = arith.constant 0 : i32
    %c0_i32_0 = arith.constant 0 : i32
    return %c0_i32, %arg0 : i32, i32
  }
}

</mosaic_0001>

<llo_original>
// kernel: forward.1
$region0: #{forward.1}
  #allocation0 [shape = 'u32[]', space=smem, size = 0x4, offset = 0x4, fixed_abs, tag = 'smem constant byte address 0x4 - core index']
  #allocation1 [shape = 'u32[144,128]{1,0:T(1,128)}', space=vmem, size = 0x12000, scoped, tag = 'internal scratch']
  #allocation2 [shape = 'f32[1]{0:T(128)S(6)}', space=smem, size = 0x200, scoped, tag = 'scoped memory for forward.1']
  %s0 = inlined_call_operand.<no memory space> [shape: f32[1], index: 0, kind: input, shape index: {}]
  %s1 = inlined_call_operand.vmem [shape: f32[8,256], index: 1, kind: input, shape index: {}]
  %s2 = inlined_call_operand.vmem [shape: f32[256,8], index: 2, kind: input, shape index: {}]
  %s3 = inlined_call_operand.vmem [shape: f32[8,256], index: 3, kind: input, shape index: {}]
  %s4 = inlined_call_operand.hbm [shape: f32[256,256], index: 4, kind: input, shape index: {}]
  %s5 = inlined_call_operand.hbm [shape: f32[256,256], index: 5, kind: input, shape index: {}]
  %s6 = inlined_call_operand.vmem [shape: f32[1,256], index: 6, kind: output, shape index: {}]
  %s7 = sld [smem:[#allocation0]]
  $region65: #{forward.1} parent=0
    _
  %s9 = ssub.s32 1, %s7
  %s10 = scalar_select 0, %s9, %s7
  %11 = sst [smem:[#allocation2]] %s0
  $region1: #{forward.1} parent=0
    #allocation3 [shape = 'u8[262144]{0}', space=vmem, size = 0x40000, scoped, tag = 'input window, operand 4']
    #allocation4 [shape = 's32[2]{0}', space=sflag, size = 0x8, scoped, tag = 'scoped memory for forward.1']
    #allocation5 [shape = 'u8[262144]{0}', space=vmem, size = 0x40000, scoped, tag = 'input window, operand 5']
    #allocation6 [shape = 's32[2]{0}', space=sflag, size = 0x8, scoped, tag = 'scoped memory for forward.1']
    %12 = vsyncpa [#allocation4], 0
    %s13 = scalar_lea.sflag [#allocation4], 1
    %14 = vsyncpa %s13, 0
    %15 = vsyncpa [#allocation6], 0
    %s16 = scalar_lea.sflag [#allocation6], 1
    %17 = vsyncpa %s16, 0
    loop: start=0, step=1, limit=4
    $region2: #{forward.1} parent=1 // loop_pre_header
      _
    $region3: #{forward.1} parent=1 // loop_header
      %s19 = sphi 0, %s23
      %p20 = scmp.ge.s32.totalorder %s19, 4
      %s27 = sphi 0, %s27
      %s29 = sphi 0, %s27
      %s30 = sphi 0, %s29
      %s44 = sphi 0, %s30
      %s48 = sphi 0, %s48
      %s50 = sphi 0, %s48
      %s51 = sphi 0, %s50
      %s65 = sphi 0, %s51
      %s69 = sphi 0, %s69
      %s71 = sphi 0, %s69
      %s72 = sphi 0, %s71
      %s86 = sphi 0, %s72
      %s92 = sphi 0, %s94
      %s95 = sphi 0, %s92
      %s96 = sphi 0, %s95
      %s112 = sphi 0, %s96
      %s118 = sphi 0, %s120
      %s121 = sphi 0, %s118
      %s122 = sphi 0, %s121
      %s138 = sphi 0, %s122
      %s144 = sphi 0, %s146
      %s147 = sphi 0, %s144
      %s148 = sphi 0, %s147
      %s164 = sphi 0, %s148
      %s170 = sphi 0, %s172
      %s173 = sphi 0, %s170
      %s174 = sphi 0, %s173
      %s190 = sphi 0, %s174
    $region4: #{forward.1} parent=1 // loop_header_branch
      %22 = sbr.rel (%p20) target = $region8
    $region5: #{forward.1} parent=1 // loop_body
      %s24 = ssub.s32 %s19, 1
      %s25 = ssub.s32 %s19, 2
      %s26 = sadd.s32 %s19, 1
      %s28 = sadd.s32 %s27, 1
      %p31 = scmp.eq.s32.totalorder %s19, 1
      %p32 = scmp.ne.s32.totalorder %s27, %s29
      %p33 = scmp.eq.s32.totalorder %s19, 0
      %p34 = por %p32, %p33
      %p35 = scmp.ne.s32.totalorder %s27, %s29
      %p36 = scmp.eq.s32.totalorder %s24, 1
      %p37 = por %p35, %p36
      %p38 = scmp.ne.s32.totalorder %s29, %s30
      %p39 = scmp.eq.s32.totalorder %s24, 0
      %p40 = por %p38, %p39
      %p41 = scmp.ne.s32.totalorder %s29, %s30
      %p42 = scmp.eq.s32.totalorder %s25, 1
      %p43 = por %p41, %p42
      %p45 = scmp.ne.s32.totalorder %s30, %s44
      %p46 = scmp.eq.s32.totalorder %s25, 0
      %p47 = por %p45, %p46
      %s49 = sadd.s32 %s48, 1
      %p52 = scmp.eq.s32.totalorder %s19, 1
      %p53 = scmp.ne.s32.totalorder %s48, %s50
      %p54 = scmp.eq.s32.totalorder %s19, 0
      %p55 = por %p53, %p54
      %p56 = scmp.ne.s32.totalorder %s48, %s50
      %p57 = scmp.eq.s32.totalorder %s24, 1
      %p58 = por %p56, %p57
      %p59 = scmp.ne.s32.totalorder %s50, %s51
      %p60 = scmp.eq.s32.totalorder %s24, 0
      %p61 = por %p59, %p60
      %p62 = scmp.ne.s32.totalorder %s50, %s51
      %p63 = scmp.eq.s32.totalorder %s25, 1
      %p64 = por %p62, %p63
      %p66 = scmp.ne.s32.totalorder %s51, %s65
      %p67 = scmp.eq.s32.totalorder %s25, 0
      %p68 = por %p66, %p67
      %s70 = sadd.s32 %s69, 1
      %p73 = scmp.eq.s32.totalorder %s19, 1
      %p74 = scmp.ne.s32.totalorder %s69, %s71
      %p75 = scmp.eq.s32.totalorder %s19, 0
      %p76 = por %p74, %p75
      %p77 = scmp.ne.s32.totalorder %s69, %s71
      %p78 = scmp.eq.s32.totalorder %s24, 1
      %p79 = por %p77, %p78
      %p80 = scmp.ne.s32.totalorder %s71, %s72
      %p81 = scmp.eq.s32.totalorder %s24, 0
      %p82 = por %p80, %p81
      %p83 = scmp.ne.s32.totalorder %s71, %s72
      %p84 = scmp.eq.s32.totalorder %s25, 1
      %p85 = por %p83, %p84
      %p87 = scmp.ne.s32.totalorder %s72, %s86
      %p88 = scmp.eq.s32.totalorder %s25, 0
      %p89 = por %p87, %p88
      %s90 = ssub.s32 %s19, %s26
      %p91 = scmp.eq.s32.totalorder %s90, 0
      %s93 = sadd.s32 %s92, 1
      %s94 = scalar_select %p91, %s92, %s93
      %p97 = pneg %p91
      %p98 = scmp.eq.s32.totalorder %s19, 1
      %p99 = por %p97, %p98
      %p100 = scmp.ne.s32.totalorder %s92, %s95
      %p101 = scmp.eq.s32.totalorder %s19, 0
      %p102 = por %p100, %p101
      %p103 = scmp.ne.s32.totalorder %s92, %s95
      %p104 = scmp.eq.s32.totalorder %s24, 1
      %p105 = por %p103, %p104
      %p106 = scmp.ne.s32.totalorder %s95, %s96
      %p107 = scmp.eq.s32.totalorder %s24, 0
      %p108 = por %p106, %p107
      %p109 = scmp.ne.s32.totalorder %s95, %s96
      %p110 = scmp.eq.s32.totalorder %s25, 1
      %p111 = por %p109, %p110
      %p113 = scmp.ne.s32.totalorder %s96, %s112
      %p114 = scmp.eq.s32.totalorder %s25, 0
      %p115 = por %p113, %p114
      %s116 = ssub.s32 %s19, %s26
      %p117 = scmp.eq.s32.totalorder %s116, 0
      %s119 = sadd.s32 %s118, 1
      %s120 = scalar_select %p117, %s118, %s119
      %p123 = pneg %p117
      %p124 = scmp.eq.s32.totalorder %s19, 1
      %p125 = por %p123, %p124
      %p126 = scmp.ne.s32.totalorder %s118, %s121
      %p127 = scmp.eq.s32.totalorder %s19, 0
      %p128 = por %p126, %p127
      %p129 = scmp.ne.s32.totalorder %s118, %s121
      %p130 = scmp.eq.s32.totalorder %s24, 1
      %p131 = por %p129, %p130
      %p132 = scmp.ne.s32.totalorder %s121, %s122
      %p133 = scmp.eq.s32.totalorder %s24, 0
      %p134 = por %p132, %p133
      %p135 = scmp.ne.s32.totalorder %s121, %s122
      %p136 = scmp.eq.s32.totalorder %s25, 1
      %p137 = por %p135, %p136
      %p139 = scmp.ne.s32.totalorder %s122, %s138
      %p140 = scmp.eq.s32.totalorder %s25, 0
      %p141 = por %p139, %p140
      %s142 = ssub.s32 %s19, %s26
      %p143 = scmp.eq.s32.totalorder %s142, 0
      %s145 = sadd.s32 %s144, 1
      %s146 = scalar_select %p143, %s144, %s145
      %p149 = pneg %p143
      %p150 = scmp.eq.s32.totalorder %s19, 1
      %p151 = por %p149, %p150
      %p152 = scmp.ne.s32.totalorder %s144, %s147
      %p153 = scmp.eq.s32.totalorder %s19, 0
      %p154 = por %p152, %p153
      %p155 = scmp.ne.s32.totalorder %s144, %s147
      %p156 = scmp.eq.s32.totalorder %s24, 1
      %p157 = por %p155, %p156
      %p158 = scmp.ne.s32.totalorder %s147, %s148
      %p159 = scmp.eq.s32.totalorder %s24, 0
      %p160 = por %p158, %p159
      %p161 = scmp.ne.s32.totalorder %s147, %s148
      %p162 = scmp.eq.s32.totalorder %s25, 1
      %p163 = por %p161, %p162
      %p165 = scmp.ne.s32.totalorder %s148, %s164
      %p166 = scmp.eq.s32.totalorder %s25, 0
      %p167 = por %p165, %p166
      %s168 = ssub.s32 %s19, %s26
      %p169 = scmp.eq.s32.totalorder %s168, 0
      %s171 = sadd.s32 %s170, 1
      %s172 = scalar_select %p169, %s170, %s171
      %p175 = pneg %p169
      %p176 = scmp.eq.s32.totalorder %s19, 1
      %p177 = por %p175, %p176
      %p178 = scmp.ne.s32.totalorder %s170, %s173
      %p179 = scmp.eq.s32.totalorder %s19, 0
      %p180 = por %p178, %p179
      %p181 = scmp.ne.s32.totalorder %s170, %s173
      %p182 = scmp.eq.s32.totalorder %s24, 1
      %p183 = por %p181, %p182
      %p184 = scmp.ne.s32.totalorder %s173, %s174
      %p185 = scmp.eq.s32.totalorder %s24, 0
      %p186 = por %p184, %p185
      %p187 = scmp.ne.s32.totalorder %s173, %s174
      %p188 = scmp.eq.s32.totalorder %s25, 1
      %p189 = por %p187, %p188
      %p191 = scmp.ne.s32.totalorder %s174, %s190
      %p192 = scmp.eq.s32.totalorder %s25, 0
      %p193 = por %p191, %p192
      %p194 = scmp.le.s32.totalorder 1, %s19
      %p195 = scmp.lt.s32.totalorder %s19, 3
      %p196 = pnand %p194, %p195
      %p197 = pneg %p196
      // Predicated region
      $region9: #{forward.1} parent=5 // pred_check
        _
      $region10: #{forward.1} parent=5 // pred_check_branch
        %199 = sbr.rel (%p196) target = $region12
      $region11: #{forward.1} parent=5 // pred_region
        %s200 = ssub.s32 %s19, 1
        // Predicated region
        $region13: #{forward.1} parent=11 // pred_check
          %p201 = pneg %p40
        $region14: #{forward.1} parent=11 // pred_check_branch
          %203 = sbr.rel (%p201) target = $region16
        $region15: #{forward.1} parent=11 // pred_region
          _
        $region16: #{forward.1} parent=11 // pred_fallthru
          _
        // Predicated region
        $region17: #{forward.1} parent=11 // pred_check
          %p204 = pneg %p61
        $region18: #{forward.1} parent=11 // pred_check_branch
          %206 = sbr.rel (%p204) target = $region20
        $region19: #{forward.1} parent=11 // pred_region
          _
        $region20: #{forward.1} parent=11 // pred_fallthru
          _
        // Predicated region
        $region21: #{forward.1} parent=11 // pred_check
          %p207 = pneg %p82
        $region22: #{forward.1} parent=11 // pred_check_branch
          %209 = sbr.rel (%p207) target = $region24
        $region23: #{forward.1} parent=11 // pred_region
          _
        $region24: #{forward.1} parent=11 // pred_fallthru
          _
      $region12: #{forward.1} parent=5 // pred_fallthru
        _
      %p210 = scmp.lt.s32.totalorder %s19, 2
      // Predicated region
      $region25: #{forward.1} parent=5 // pred_check
        %p211 = pneg %p210
      $region26: #{forward.1} parent=5 // pred_check_branch
        %213 = sbr.rel (%p211) target = $region28
      $region27: #{forward.1} parent=5 // pred_region
        // Predicated region
        $region29: #{forward.1} parent=27 // pred_check
          %p214 = pneg %p102
        $region30: #{forward.1} parent=27 // pred_check_branch
          %216 = sbr.rel (%p214) target = $region32
        $region31: #{forward.1} parent=27 // pred_region
          %p217 = scmp.lt.s32.totalorder %s19, 1
          %s218 = scalar_select %p217, %s19, 1
          %s219 = smul.addr %s218, 8
          %s220 = scalar_lea.vmem %s3, %s219
        $region32: #{forward.1} parent=27 // pred_fallthru
          _
        // Predicated region
        $region33: #{forward.1} parent=27 // pred_check
          %p221 = pneg %p128
        $region34: #{forward.1} parent=27 // pred_check_branch
          %223 = sbr.rel (%p221) target = $region36
        $region35: #{forward.1} parent=27 // pred_region
          %s224 = sand.u32 %s118, 1
          %s225 = scalar_lea.sflag [#allocation4], %s224
          %s226 = sand.u32 %s118, 1
          %s227 = smul.addr %s226, 256
          %s228 = scalar_lea.vmem [#allocation3], %s227
          %s230 = ssub.s32 4096, 4096
          %231 = vsyncadd %s225, %s230
          %s232 = smul.addr %s19, 128
          %s233 = scalar_lea.hbm %s4, %s232
          %s234 = sshll.u32 %s228, 4
          %s235 = int_to_ptr.vmem [resolvable:$true] %s234
          %240 = dma.hbm_to_vmem [thread:$0]  %s233, 4096, %s235, %s225, 256, 128, 8
        $region36: #{forward.1} parent=27 // pred_fallthru
          _
        // Predicated region
        $region37: #{forward.1} parent=27 // pred_check
          %p241 = pneg %p154
        $region38: #{forward.1} parent=27 // pred_check_branch
          %243 = sbr.rel (%p241) target = $region40
        $region39: #{forward.1} parent=27 // pred_region
          %s244 = sand.u32 %s144, 1
          %s245 = scalar_lea.sflag [#allocation6], %s244
          %s246 = sand.u32 %s144, 1
          %s247 = smul.addr %s246, 256
          %s248 = scalar_lea.vmem [#allocation5], %s247
          %s250 = ssub.s32 4096, 4096
          %251 = vsyncadd %s245, %s250
          %s252 = smul.addr %s19, 128
          %s253 = scalar_lea.hbm %s5, %s252
          %s254 = sshll.u32 %s248, 4
          %s255 = int_to_ptr.vmem [resolvable:$true] %s254
          %260 = dma.hbm_to_vmem [thread:$0]  %s253, 4096, %s255, %s245, 256, 128, 8
        $region40: #{forward.1} parent=27 // pred_fallthru
          _
      $region28: #{forward.1} parent=5 // pred_fallthru
        _
      %p261 = scmp.le.s32.totalorder 1, %s19
      %p262 = scmp.lt.s32.totalorder %s19, 3
      %p263 = pnand %p261, %p262
      %p264 = pneg %p263
      // Predicated region
      $region41: #{forward.1} parent=5 // pred_check
        _
      $region42: #{forward.1} parent=5 // pred_check_branch
        %266 = sbr.rel (%p263) target = $region44
      $region43: #{forward.1} parent=5 // pred_region
        %s267 = ssub.s32 %s19, 1
        %s268 = sand.u32 %s121, 1
        %s269 = scalar_lea.sflag [#allocation4], %s268
        %s270 = sand.u32 %s121, 1
        %s271 = smul.addr %s270, 256
        %s272 = scalar_lea.vmem [#allocation3], %s271
        // Predicated region
        $region45: #{forward.1} parent=43 // pred_check
          %p273 = pneg %p134
        $region46: #{forward.1} parent=43 // pred_check_branch
          %275 = sbr.rel (%p273) target = $region48
        $region47: #{forward.1} parent=43 // pred_region
          %276 = dma.done %s269, 4096
        $region48: #{forward.1} parent=43 // pred_fallthru
          _
        %s277 = sand.u32 %s147, 1
        %s278 = scalar_lea.sflag [#allocation6], %s277
        %s279 = sand.u32 %s147, 1
        %s280 = smul.addr %s279, 256
        %s281 = scalar_lea.vmem [#allocation5], %s280
        // Predicated region
        $region49: #{forward.1} parent=43 // pred_check
          %p282 = pneg %p160
        $region50: #{forward.1} parent=43 // pred_check_branch
          %284 = sbr.rel (%p282) target = $region52
        $region51: #{forward.1} parent=43 // pred_region
          %285 = dma.done %s278, 4096
        $region52: #{forward.1} parent=43 // pred_fallthru
          _
        %p286 = pneg %p40
        %p287 = pneg %p37
        %p288 = pneg %p61
        %p289 = pneg %p58
        %p290 = pneg %p82
        %p291 = pneg %p79
        %p292 = scmp.lt.s32.totalorder %s24, 1
        %s293 = scalar_select %p292, %s24, 1
        %s294 = smul.addr %s293, 8
        %s295 = scalar_lea.vmem %s3, %s294
        %p296 = pneg %p108
        %p297 = pneg %p105
        %s298 = sand.u32 %s121, 1
        %s299 = scalar_lea.sflag [#allocation4], %s298
        %s300 = sand.u32 %s121, 1
        %s301 = smul.addr %s300, 256
        %s302 = scalar_lea.vmem [#allocation3], %s301
        %p303 = pneg %p134
        %p304 = pneg %p131
        %s305 = sand.u32 %s147, 1
        %s306 = scalar_lea.sflag [#allocation6], %s305
        %s307 = sand.u32 %s147, 1
        %s308 = smul.addr %s307, 256
        %s309 = scalar_lea.vmem [#allocation5], %s308
        %p310 = pneg %p160
        %p311 = pneg %p157
        %p312 = pneg %p186
        %p313 = pneg %p183
        %p314 = scmp.lt.s32.totalorder %s24, 1
        %s315 = scalar_select %p314, %s24, 1
        %s316 = scalar_lea.vmem %s6, %s315
        %p317 = scmp.lt.s32.totalorder %s24, 1
        %s318 = scalar_select %p317, %s24, 1
        %s319 = smul.addr %s318, 8
        %s320 = scalar_lea.vmem %s3, %s319
        %p321 = scmp.lt.s32.totalorder %s24, 1
        %s322 = scalar_select %p321, %s24, 1
        %s323 = scalar_lea.vmem %s6, %s322
        %s324 = sld [smem:[#allocation2]]
        %v325 = vld [vmem:[%s2] sm:$0xff]
        %v326 = vld [vmem:[%s2 + $0x8] sm:$0xff]
        %v327 = vld [vmem:[%s2 + $0x10] sm:$0xff]
        %v328 = vld [vmem:[%s2 + $0x18] sm:$0xff]
        %v329 = vld [vmem:[%s2 + $0x20] sm:$0xff]
        %v330 = vld [vmem:[%s2 + $0x28] sm:$0xff]
        %v331 = vld [vmem:[%s2 + $0x30] sm:$0xff]
        %v332 = vld [vmem:[%s2 + $0x38] sm:$0xff]
        %v333 = vld [vmem:[%s2 + $0x40] sm:$0xff]
        %v334 = vld [vmem:[%s2 + $0x48] sm:$0xff]
        %v335 = vld [vmem:[%s2 + $0x50] sm:$0xff]
        %v336 = vld [vmem:[%s2 + $0x58] sm:$0xff]
        %v337 = vld [vmem:[%s2 + $0x60] sm:$0xff]
        %v338 = vld [vmem:[%s2 + $0x68] sm:$0xff]
        %v339 = vld [vmem:[%s2 + $0x70] sm:$0xff]
        %v340 = vld [vmem:[%s2 + $0x78] sm:$0xff]
        %v341 = vld [vmem:[%s2 + $0x80] sm:$0xff]
        %v342 = vld [vmem:[%s2 + $0x88] sm:$0xff]
        %v343 = vld [vmem:[%s2 + $0x90] sm:$0xff]
        %v344 = vld [vmem:[%s2 + $0x98] sm:$0xff]
        %v345 = vld [vmem:[%s2 + $0xa0] sm:$0xff]
        %v346 = vld [vmem:[%s2 + $0xa8] sm:$0xff]
        %v347 = vld [vmem:[%s2 + $0xb0] sm:$0xff]
        %v348 = vld [vmem:[%s2 + $0xb8] sm:$0xff]
        %v349 = vld [vmem:[%s2 + $0xc0] sm:$0xff]
        %v350 = vld [vmem:[%s2 + $0xc8] sm:$0xff]
        %v351 = vld [vmem:[%s2 + $0xd0] sm:$0xff]
        %v352 = vld [vmem:[%s2 + $0xd8] sm:$0xff]
        %v353 = vld [vmem:[%s2 + $0xe0] sm:$0xff]
        %v354 = vld [vmem:[%s2 + $0xe8] sm:$0xff]
        %v355 = vld [vmem:[%s2 + $0xf0] sm:$0xff]
        %v356 = vld [vmem:[%s2 + $0xf8] sm:$0xff]
        %v357 = vld [vmem:[%s320] sm:$0xff]
        %vm358 = vcmask 64512
        %v360 = vsel %vm358, %v325, 0
        %v363 = vsel %vm358, %v326, 0
        %v366 = vsel %vm358, %v327, 0
        %v369 = vsel %vm358, %v328, 0
        %v372 = vsel %vm358, %v329, 0
        %v375 = vsel %vm358, %v330, 0
        %v378 = vsel %vm358, %v331, 0
        %v381 = vsel %vm358, %v332, 0
        %v384 = vsel %vm358, %v333, 0
        %v387 = vsel %vm358, %v334, 0
        %v390 = vsel %vm358, %v335, 0
        %v393 = vsel %vm358, %v336, 0
        %v396 = vsel %vm358, %v337, 0
        %v399 = vsel %vm358, %v338, 0
        %v402 = vsel %vm358, %v339, 0
        %v405 = vsel %vm358, %v340, 0
        %v408 = vsel %vm358, %v341, 0
        %v411 = vsel %vm358, %v342, 0
        %v414 = vsel %vm358, %v343, 0
        %v417 = vsel %vm358, %v344, 0
        %v420 = vsel %vm358, %v345, 0
        %v423 = vsel %vm358, %v346, 0
        %v426 = vsel %vm358, %v347, 0
        %v429 = vsel %vm358, %v348, 0
        %v432 = vsel %vm358, %v349, 0
        %v435 = vsel %vm358, %v350, 0
        %v438 = vsel %vm358, %v351, 0
        %v441 = vsel %vm358, %v352, 0
        %v444 = vsel %vm358, %v353, 0
        %v447 = vsel %vm358, %v354, 0
        %v450 = vsel %vm358, %v355, 0
        %v453 = vsel %vm358, %v356, 0
        %455 = vmatprep.subr.mxu0 0.0
        %456 = vmatpush1.msra.mxu0 %v357
        %457 = vmatprep.subr.mxu0 0.0
        %458 = vmatpush1.msra.mxu0 0.0
        %459 = vmatprep.subr.mxu0 0.0
        %460 = vmatpush1.msra.mxu0 0.0
        %461 = vmatprep.subr.mxu0 0.0
        %462 = vmatpush1.msra.mxu0 0.0
        %463 = vmatprep.subr.mxu0 0.0
        %464 = vmatpush1.msra.mxu0 0.0
        %465 = vmatprep.subr.mxu0 0.0
        %466 = vmatpush1.msra.mxu0 0.0
        %467 = vmatprep.subr.mxu0 0.0
        %468 = vmatpush1.msra.mxu0 0.0
        %469 = vmatprep.subr.mxu0 0.0
        %470 = vmatpush1.msra.mxu0 0.0
        %471 = vmatprep.subr.mxu0 0.0
        %472 = vmatpush1.msra.mxu0 0.0
        %473 = vmatprep.subr.mxu0 0.0
        %474 = vmatpush1.msra.mxu0 0.0
        %475 = vmatprep.subr.mxu0 0.0
        %476 = vmatpush1.msra.mxu0 0.0
        %477 = vmatprep.subr.mxu0 0.0
        %478 = vmatpush1.msra.mxu0 0.0
        %479 = vmatprep.subr.mxu0 0.0
        %480 = vmatpush1.msra.mxu0 0.0
        %481 = vmatprep.subr.mxu0 0.0
        %482 = vmatpush1.msra.mxu0 0.0
        %483 = vmatprep.subr.mxu0 0.0
        %484 = vmatpush1.msra.mxu0 0.0
        %485 = vmatprep.subr.mxu0 0.0
        %486 = vmatpush1.msra.mxu0 0.0
        %487 = vmatprep.subr.mxu0 0.0
        %488 = vmatpush1.msra.mxu0 0.0
        %489 = vmatprep.subr.mxu0 0.0
        %490 = vmatpush1.msra.mxu0 0.0
        %491 = vmatprep.subr.mxu0 0.0
        %492 = vmatpush1.msra.mxu0 0.0
        %493 = vmatprep.subr.mxu0 0.0
        %494 = vmatpush1.msra.mxu0 0.0
        %495 = vmatprep.subr.mxu0 0.0
        %496 = vmatpush1.msra.mxu0 0.0
        %497 = vmatprep.subr.mxu0 0.0
        %498 = vmatpush1.msra.mxu0 0.0
        %499 = vmatprep.subr.mxu0 0.0
        %500 = vmatpush1.msra.mxu0 0.0
        %501 = vmatprep.subr.mxu0 0.0
        %502 = vmatpush1.msra.mxu0 0.0
        %503 = vmatprep.subr.mxu0 0.0
        %504 = vmatpush1.msra.mxu0 0.0
        %505 = vmatprep.subr.mxu0 0.0
        %506 = vmatpush1.msra.mxu0 0.0
        %507 = vmatprep.subr.mxu0 0.0
        %508 = vmatpush1.msra.mxu0 0.0
        %509 = vmatprep.subr.mxu0 0.0
        %510 = vmatpush1.msra.mxu0 0.0
        %511 = vmatprep.subr.mxu0 0.0
        %512 = vmatpush1.msra.mxu0 0.0
        %513 = vmatprep.subr.mxu0 0.0
        %514 = vmatpush1.msra.mxu0 0.0
        %515 = vmatprep.subr.mxu0 0.0
        %516 = vmatpush1.msra.mxu0 0.0
        %517 = vmatprep.subr.mxu0 0.0
        %518 = vmatpush1.msra.mxu0 0.0
        %519 = vmatprep.mubr.f32.mxu0 0.0
        %520 = vmatmul.mubr.f32.gmra.mrb[0].mxu0 %v360
        %v521 = vpop.f32.mrb[0].mxu0
        %v522 = vadd.f32 0.0, %v521
        %v523 = vpop.f32.mrb[0].mxu0
        %524 = vmatprep.mubr.f32.mxu0 0.0
        %525 = vmatmul.mubr.f32.gmra.mrb[0].mxu0 %v363
        %v526 = vpop.f32.mrb[0].mxu0
        %v527 = vadd.f32 0.0, %v526
        %v528 = vpop.f32.mrb[0].mxu0
        %529 = vmatprep.mubr.f32.mxu0 0.0
        %530 = vmatmul.mubr.f32.gmra.mrb[0].mxu0 %v366
        %v531 = vpop.f32.mrb[0].mxu0
        %v532 = vadd.f32 0.0, %v531
        %v533 = vpop.f32.mrb[0].mxu0
        %534 = vmatprep.mubr.f32.mxu0 0.0
        %535 = vmatmul.mubr.f32.gmra.mrb[0].mxu0 %v369
        %v536 = vpop.f32.mrb[0].mxu0
        %v537 = vadd.f32 0.0, %v536
        %v538 = vpop.f32.mrb[0].mxu0
        %539 = vmatprep.mubr.f32.mxu0 0.0
        %540 = vmatmul.mubr.f32.gmra.mrb[0].mxu0 %v372
        %v541 = vpop.f32.mrb[0].mxu0
        %v542 = vadd.f32 0.0, %v541
        %v543 = vpop.f32.mrb[0].mxu0
        %544 = vmatprep.mubr.f32.mxu0 0.0
        %545 = vmatmul.mubr.f32.gmra.mrb[0].mxu0 %v375
        %v546 = vpop.f32.mrb[0].mxu0
        %v547 = vadd.f32 0.0, %v546
        %v548 = vpop.f32.mrb[0].mxu0
        %549 = vmatprep.mubr.f32.mxu0 0.0
        %550 = vmatmul.mubr.f32.gmra.mrb[0].mxu0 %v378
        %v551 = vpop.f32.mrb[0].mxu0
        %v552 = vadd.f32 0.0, %v551
        %v553 = vpop.f32.mrb[0].mxu0
        %554 = vmatprep.mubr.f32.mxu0 0.0
        %555 = vmatmul.mubr.f32.gmra.mrb[0].mxu0 %v381
        %v556 = vpop.f32.mrb[0].mxu0
        %v557 = vadd.f32 0.0, %v556
        %v558 = vpop.f32.mrb[0].mxu0
        %559 = vmatprep.mubr.f32.mxu0 0.0
        %560 = vmatmul.mubr.f32.gmra.mrb[0].mxu0 %v384
        %v561 = vpop.f32.mrb[0].mxu0
        %v562 = vadd.f32 0.0, %v561
        %v563 = vpop.f32.mrb[0].mxu0
        %564 = vmatprep.mubr.f32.mxu0 0.0
        %565 = vmatmul.mubr.f32.gmra.mrb[0].mxu0 %v387
        %v566 = vpop.f32.mrb[0].mxu0
        %v567 = vadd.f32 0.0, %v566
        %v568 = vpop.f32.mrb[0].mxu0
        %569 = vmatprep.mubr.f32.mxu0 0.0
        %570 = vmatmul.mubr.f32.gmra.mrb[0].mxu0 %v390
        %v571 = vpop.f32.mrb[0].mxu0
        %v572 = vadd.f32 0.0, %v571
        %v573 = vpop.f32.mrb[0].mxu0
        %574 = vmatprep.mubr.f32.mxu0 0.0
        %575 = vmatmul.mubr.f32.gmra.mrb[0].mxu0 %v393
        %v576 = vpop.f32.mrb[0].mxu0
        %v577 = vadd.f32 0.0, %v576
        %v578 = vpop.f32.mrb[0].mxu0
        %579 = vmatprep.mubr.f32.mxu0 0.0
        %580 = vmatmul.mubr.f32.gmra.mrb[0].mxu0 %v396
        %v581 = vpop.f32.mrb[0].mxu0
        %v582 = vadd.f32 0.0, %v581
        %v583 = vpop.f32.mrb[0].mxu0
        %584 = vmatprep.mubr.f32.mxu0 0.0
        %585 = vmatmul.mubr.f32.gmra.mrb[0].mxu0 %v399
        %v586 = vpop.f32.mrb[0].mxu0
        %v587 = vadd.f32 0.0, %v586
        %v588 = vpop.f32.mrb[0].mxu0
        %589 = vmatprep.mubr.f32.mxu0 0.0
        %590 = vmatmul.mubr.f32.gmra.mrb[0].mxu0 %v402
        %v591 = vpop.f32.mrb[0].mxu0
        %v592 = vadd.f32 0.0, %v591
        %v593 = vpop.f32.mrb[0].mxu0
        %594 = vmatprep.mubr.f32.mxu0 0.0
        %595 = vmatmul.mubr.f32.gmra.mrb[0].mxu0 %v405
        %v596 = vpop.f32.mrb[0].mxu0
        %v597 = vadd.f32 0.0, %v596
        %v598 = vpop.f32.mrb[0].mxu0
        %599 = vmatprep.mubr.f32.mxu0 0.0
        %600 = vmatmul.mubr.f32.gmra.mrb[0].mxu0 %v408
        %v601 = vpop.f32.mrb[0].mxu0
        %v602 = vadd.f32 0.0, %v601
        %v603 = vpop.f32.mrb[0].mxu0
        %604 = vmatprep.mubr.f32.mxu0 0.0
        %605 = vmatmul.mubr.f32.gmra.mrb[0].mxu0 %v411
        %v606 = vpop.f32.mrb[0].mxu0
        %v607 = vadd.f32 0.0, %v606
        %v608 = vpop.f32.mrb[0].mxu0
        %609 = vmatprep.mubr.f32.mxu0 0.0
        %610 = vmatmul.mubr.f32.gmra.mrb[0].mxu0 %v414
        %v611 = vpop.f32.mrb[0].mxu0
        %v612 = vadd.f32 0.0, %v611
        %v613 = vpop.f32.mrb[0].mxu0
        %614 = vmatprep.mubr.f32.mxu0 0.0
        %615 = vmatmul.mubr.f32.gmra.mrb[0].mxu0 %v417
        %v616 = vpop.f32.mrb[0].mxu0
        %v617 = vadd.f32 0.0, %v616
        %v618 = vpop.f32.mrb[0].mxu0
        %619 = vmatprep.mubr.f32.mxu0 0.0
        %620 = vmatmul.mubr.f32.gmra.mrb[0].mxu0 %v420
        %v621 = vpop.f32.mrb[0].mxu0
        %v622 = vadd.f32 0.0, %v621
        %v623 = vpop.f32.mrb[0].mxu0
        %624 = vmatprep.mubr.f32.mxu0 0.0
        %625 = vmatmul.mubr.f32.gmra.mrb[0].mxu0 %v423
        %v626 = vpop.f32.mrb[0].mxu0
        %v627 = vadd.f32 0.0, %v626
        %v628 = vpop.f32.mrb[0].mxu0
        %629 = vmatprep.mubr.f32.mxu0 0.0
        %630 = vmatmul.mubr.f32.gmra.mrb[0].mxu0 %v426
        %v631 = vpop.f32.mrb[0].mxu0
        %v632 = vadd.f32 0.0, %v631
        %v633 = vpop.f32.mrb[0].mxu0
        %634 = vmatprep.mubr.f32.mxu0 0.0
        %635 = vmatmul.mubr.f32.gmra.mrb[0].mxu0 %v429
        %v636 = vpop.f32.mrb[0].mxu0
        %v637 = vadd.f32 0.0, %v636
        %v638 = vpop.f32.mrb[0].mxu0
        %639 = vmatprep.mubr.f32.mxu0 0.0
        %640 = vmatmul.mubr.f32.gmra.mrb[0].mxu0 %v432
        %v641 = vpop.f32.mrb[0].mxu0
        %v642 = vadd.f32 0.0, %v641
        %v643 = vpop.f32.mrb[0].mxu0
        %644 = vmatprep.mubr.f32.mxu0 0.0
        %645 = vmatmul.mubr.f32.gmra.mrb[0].mxu0 %v435
        %v646 = vpop.f32.mrb[0].mxu0
        %v647 = vadd.f32 0.0, %v646
        %v648 = vpop.f32.mrb[0].mxu0
        %649 = vmatprep.mubr.f32.mxu0 0.0
        %650 = vmatmul.mubr.f32.gmra.mrb[0].mxu0 %v438
        %v651 = vpop.f32.mrb[0].mxu0
        %v652 = vadd.f32 0.0, %v651
        %v653 = vpop.f32.mrb[0].mxu0
        %654 = vmatprep.mubr.f32.mxu0 0.0
        %655 = vmatmul.mubr.f32.gmra.mrb[0].mxu0 %v441
        %v656 = vpop.f32.mrb[0].mxu0
        %v657 = vadd.f32 0.0, %v656
        %v658 = vpop.f32.mrb[0].mxu0
        %659 = vmatprep.mubr.f32.mxu0 0.0
        %660 = vmatmul.mubr.f32.gmra.mrb[0].mxu0 %v444
        %v661 = vpop.f32.mrb[0].mxu0
        %v662 = vadd.f32 0.0, %v661
        %v663 = vpop.f32.mrb[0].mxu0
        %664 = vmatprep.mubr.f32.mxu0 0.0
        %665 = vmatmul.mubr.f32.gmra.mrb[0].mxu0 %v447
        %v666 = vpop.f32.mrb[0].mxu0
        %v667 = vadd.f32 0.0, %v666
        %v668 = vpop.f32.mrb[0].mxu0
        %669 = vmatprep.mubr.f32.mxu0 0.0
        %670 = vmatmul.mubr.f32.gmra.mrb[0].mxu0 %v450
        %v671 = vpop.f32.mrb[0].mxu0
        %v672 = vadd.f32 0.0, %v671
        %v673 = vpop.f32.mrb[0].mxu0
        %674 = vmatprep.mubr.f32.mxu0 0.0
        %675 = vmatmul.mubr.f32.gmra.mrb[0].mxu0 %v453
        %v676 = vpop.f32.mrb[0].mxu0
        %v677 = vadd.f32 0.0, %v676
        %v678 = vpop.f32.mrb[0].mxu0
        %679 = vdwg.mxu0
        %v680 = vld [vmem:[%s272] sm:$0xff]
        %v681 = vld [vmem:[%s272 + $0x8] sm:$0xff]
        %v682 = vld [vmem:[%s272 + $0x10] sm:$0xff]
        %v683 = vld [vmem:[%s272 + $0x18] sm:$0xff]
        %v684 = vld [vmem:[%s272 + $0x20] sm:$0xff]
        %v685 = vld [vmem:[%s272 + $0x28] sm:$0xff]
        %v686 = vld [vmem:[%s272 + $0x30] sm:$0xff]
        %v687 = vld [vmem:[%s272 + $0x38] sm:$0xff]
        %v688 = vld [vmem:[%s272 + $0x40] sm:$0xff]
        %v689 = vld [vmem:[%s272 + $0x48] sm:$0xff]
        %v690 = vld [vmem:[%s272 + $0x50] sm:$0xff]
        %v691 = vld [vmem:[%s272 + $0x58] sm:$0xff]
        %v692 = vld [vmem:[%s272 + $0x60] sm:$0xff]
        %v693 = vld [vmem:[%s272 + $0x68] sm:$0xff]
        %v694 = vld [vmem:[%s272 + $0x70] sm:$0xff]
        %v695 = vld [vmem:[%s272 + $0x78] sm:$0xff]
        %v696 = vld [vmem:[%s272 + $0x80] sm:$0xff]
        %v697 = vld [vmem:[%s272 + $0x88] sm:$0xff]
        %v698 = vld [vmem:[%s272 + $0x90] sm:$0xff]
        %v699 = vld [vmem:[%s272 + $0x98] sm:$0xff]
        %v700 = vld [vmem:[%s272 + $0xa0] sm:$0xff]
        %v701 = vld [vmem:[%s272 + $0xa8] sm:$0xff]
        %v702 = vld [vmem:[%s272 + $0xb0] sm:$0xff]
        %v703 = vld [vmem:[%s272 + $0xb8] sm:$0xff]
        %v704 = vld [vmem:[%s272 + $0xc0] sm:$0xff]
        %v705 = vld [vmem:[%s272 + $0xc8] sm:$0xff]
        %v706 = vld [vmem:[%s272 + $0xd0] sm:$0xff]
        %v707 = vld [vmem:[%s272 + $0xd8] sm:$0xff]
        %v708 = vld [vmem:[%s272 + $0xe0] sm:$0xff]
        %v709 = vld [vmem:[%s272 + $0xe8] sm:$0xff]
        %v710 = vld [vmem:[%s272 + $0xf0] sm:$0xff]
        %v711 = vld [vmem:[%s272 + $0xf8] sm:$0xff]
        %v712 = vstv %s324
        %v713 = vmul.f32 %v712, %v522
        %v714 = vmul.f32 %v712, %v527
        %v715 = vmul.f32 %v712, %v532
        %v716 = vmul.f32 %v712, %v537
        %v717 = vmul.f32 %v712, %v542
        %v718 = vmul.f32 %v712, %v547
        %v719 = vmul.f32 %v712, %v552
        %v720 = vmul.f32 %v712, %v557
        %v721 = vmul.f32 %v712, %v562
        %v722 = vmul.f32 %v712, %v567
        %v723 = vmul.f32 %v712, %v572
        %v724 = vmul.f32 %v712, %v577
        %v725 = vmul.f32 %v712, %v582
        %v726 = vmul.f32 %v712, %v587
        %v727 = vmul.f32 %v712, %v592
        %v728 = vmul.f32 %v712, %v597
        %v729 = vmul.f32 %v712, %v602
        %v730 = vmul.f32 %v712, %v607
        %v731 = vmul.f32 %v712, %v612
        %v732 = vmul.f32 %v712, %v617
        %v733 = vmul.f32 %v712, %v622
        %v734 = vmul.f32 %v712, %v627
        %v735 = vmul.f32 %v712, %v632
        %v736 = vmul.f32 %v712, %v637
        %v737 = vmul.f32 %v712, %v642
        %v738 = vmul.f32 %v712, %v647
        %v739 = vmul.f32 %v712, %v652
        %v740 = vmul.f32 %v712, %v657
        %v741 = vmul.f32 %v712, %v662
        %v742 = vmul.f32 %v712, %v667
        %v743 = vmul.f32 %v712, %v672
        %v744 = vmul.f32 %v712, %v677
        %v745 = vsub.f32 %v680, %v713
        %v746 = vsub.f32 %v681, %v714
        %v747 = vsub.f32 %v682, %v715
        %v748 = vsub.f32 %v683, %v716
        %v749 = vsub.f32 %v684, %v717
        %v750 = vsub.f32 %v685, %v718
        %v751 = vsub.f32 %v686, %v719
        %v752 = vsub.f32 %v687, %v720
        %v753 = vsub.f32 %v688, %v721
        %v754 = vsub.f32 %v689, %v722
        %v755 = vsub.f32 %v690, %v723
        %v756 = vsub.f32 %v691, %v724
        %v757 = vsub.f32 %v692, %v725
        %v758 = vsub.f32 %v693, %v726
        %v759 = vsub.f32 %v694, %v727
        %v760 = vsub.f32 %v695, %v728
        %v761 = vsub.f32 %v696, %v729
        %v762 = vsub.f32 %v697, %v730
        %v763 = vsub.f32 %v698, %v731
        %v764 = vsub.f32 %v699, %v732
        %v765 = vsub.f32 %v700, %v733
        %v766 = vsub.f32 %v701, %v734
        %v767 = vsub.f32 %v702, %v735
        %v768 = vsub.f32 %v703, %v736
        %v769 = vsub.f32 %v704, %v737
        %v770 = vsub.f32 %v705, %v738
        %v771 = vsub.f32 %v706, %v739
        %v772 = vsub.f32 %v707, %v740
        %v773 = vsub.f32 %v708, %v741
        %v774 = vsub.f32 %v709, %v742
        %v775 = vsub.f32 %v710, %v743
        %v776 = vsub.f32 %v711, %v744
        %v777 = vld [vmem:[%s1] sm:$0xff]
        %v778 = vld [vmem:[%s1 + $0x8] sm:$0xff]
        %779 = vmatprep.subr.mxu0 0.0
        %780 = vmatpush1.msra.mxu0 %v745
        %781 = vmatprep.subr.mxu0 0.0
        %782 = vmatpush1.msra.mxu0 %v746
        %783 = vmatprep.subr.mxu0 0.0
        %784 = vmatpush1.msra.mxu0 %v747
        %785 = vmatprep.subr.mxu0 0.0
        %786 = vmatpush1.msra.mxu0 %v748
        %787 = vmatprep.subr.mxu0 0.0
        %788 = vmatpush1.msra.mxu0 %v749
        %789 = vmatprep.subr.mxu0 0.0
        %790 = vmatpush1.msra.mxu0 %v750
        %791 = vmatprep.subr.mxu0 0.0
        %792 = vmatpush1.msra.mxu0 %v751
        %793 = vmatprep.subr.mxu0 0.0
        %794 = vmatpush1.msra.mxu0 %v752
        %795 = vmatprep.subr.mxu0 0.0
        %796 = vmatpush1.msra.mxu0 %v753
        %797 = vmatprep.subr.mxu0 0.0
        %798 = vmatpush1.msra.mxu0 %v754
        %799 = vmatprep.subr.mxu0 0.0
        %800 = vmatpush1.msra.mxu0 %v755
        %801 = vmatprep.subr.mxu0 0.0
        %802 = vmatpush1.msra.mxu0 %v756
        %803 = vmatprep.subr.mxu0 0.0
        %804 = vmatpush1.msra.mxu0 %v757
        %805 = vmatprep.subr.mxu0 0.0
        %806 = vmatpush1.msra.mxu0 %v758
        %807 = vmatprep.subr.mxu0 0.0
        %808 = vmatpush1.msra.mxu0 %v759
        %809 = vmatprep.subr.mxu0 0.0
        %810 = vmatpush1.msra.mxu0 %v760
        %811 = vmatprep.subr.mxu0 0.0
        %812 = vmatpush1.msra.mxu0 %v761
        %813 = vmatprep.subr.mxu0 0.0
        %814 = vmatpush1.msra.mxu0 %v762
        %815 = vmatprep.subr.mxu0 0.0
        %816 = vmatpush1.msra.mxu0 %v763
        %817 = vmatprep.subr.mxu0 0.0
        %818 = vmatpush1.msra.mxu0 %v764
        %819 = vmatprep.subr.mxu0 0.0
        %820 = vmatpush1.msra.mxu0 %v765
        %821 = vmatprep.subr.mxu0 0.0
        %822 = vmatpush1.msra.mxu0 %v766
        %823 = vmatprep.subr.mxu0 0.0
        %824 = vmatpush1.msra.mxu0 %v767
        %825 = vmatprep.subr.mxu0 0.0
        %826 = vmatpush1.msra.mxu0 %v768
        %827 = vmatprep.subr.mxu0 0.0
        %828 = vmatpush1.msra.mxu0 %v769
        %829 = vmatprep.subr.mxu0 0.0
        %830 = vmatpush1.msra.mxu0 %v770
        %831 = vmatprep.subr.mxu0 0.0
        %832 = vmatpush1.msra.mxu0 %v771
        %833 = vmatprep.subr.mxu0 0.0
        %834 = vmatpush1.msra.mxu0 %v772
        %835 = vmatprep.subr.mxu0 0.0
        %836 = vmatpush1.msra.mxu0 %v773
        %837 = vmatprep.subr.mxu0 0.0
        %838 = vmatpush1.msra.mxu0 %v774
        %839 = vmatprep.subr.mxu0 0.0
        %840 = vmatpush1.msra.mxu0 %v775
        %841 = vmatprep.subr.mxu0 0.0
        %842 = vmatpush1.msra.mxu0 %v776
        %843 = vmatprep.mubr.f32.mxu0 %v778
        %844 = vmatmul.mubr.f32.gmra.mrb[0].mxu0 %v777
        %v845 = vpop.f32.mrb[0].mxu0
        %v846 = vadd.f32 0.0, %v845
        %v847 = vpop.f32.mrb[0].mxu0
        %848 = vdwg.mxu0
        %v849 = vld [vmem:[%s281] sm:$0xff]
        %v850 = vld [vmem:[%s281 + $0x8] sm:$0xff]
        %v851 = vld [vmem:[%s281 + $0x10] sm:$0xff]
        %v852 = vld [vmem:[%s281 + $0x18] sm:$0xff]
        %v853 = vld [vmem:[%s281 + $0x20] sm:$0xff]
        %v854 = vld [vmem:[%s281 + $0x28] sm:$0xff]
        %v855 = vld [vmem:[%s281 + $0x30] sm:$0xff]
        %v856 = vld [vmem:[%s281 + $0x38] sm:$0xff]
        %v857 = vld [vmem:[%s281 + $0x40] sm:$0xff]
        %v858 = vld [vmem:[%s281 + $0x48] sm:$0xff]
        %v859 = vld [vmem:[%s281 + $0x50] sm:$0xff]
        %v860 = vld [vmem:[%s281 + $0x58] sm:$0xff]
        %v861 = vld [vmem:[%s281 + $0x60] sm:$0xff]
        %v862 = vld [vmem:[%s281 + $0x68] sm:$0xff]
        %v863 = vld [vmem:[%s281 + $0x70] sm:$0xff]
        %v864 = vld [vmem:[%s281 + $0x78] sm:$0xff]
        %v865 = vld [vmem:[%s281 + $0x80] sm:$0xff]
        %v866 = vld [vmem:[%s281 + $0x88] sm:$0xff]
        %v867 = vld [vmem:[%s281 + $0x90] sm:$0xff]
        %v868 = vld [vmem:[%s281 + $0x98] sm:$0xff]
        %v869 = vld [vmem:[%s281 + $0xa0] sm:$0xff]
        %v870 = vld [vmem:[%s281 + $0xa8] sm:$0xff]
        %v871 = vld [vmem:[%s281 + $0xb0] sm:$0xff]
        %v872 = vld [vmem:[%s281 + $0xb8] sm:$0xff]
        %v873 = vld [vmem:[%s281 + $0xc0] sm:$0xff]
        %v874 = vld [vmem:[%s281 + $0xc8] sm:$0xff]
        %v875 = vld [vmem:[%s281 + $0xd0] sm:$0xff]
        %v876 = vld [vmem:[%s281 + $0xd8] sm:$0xff]
        %v877 = vld [vmem:[%s281 + $0xe0] sm:$0xff]
        %v878 = vld [vmem:[%s281 + $0xe8] sm:$0xff]
        %v879 = vld [vmem:[%s281 + $0xf0] sm:$0xff]
        %v880 = vld [vmem:[%s281 + $0xf8] sm:$0xff]
        %v881 = vmul.f32 %v849, %v745
        %v882 = vmul.f32 %v850, %v746
        %v883 = vmul.f32 %v851, %v747
        %v884 = vmul.f32 %v852, %v748
        %v885 = vmul.f32 %v853, %v749
        %v886 = vmul.f32 %v854, %v750
        %v887 = vmul.f32 %v855, %v751
        %v888 = vmul.f32 %v856, %v752
        %v889 = vmul.f32 %v857, %v753
        %v890 = vmul.f32 %v858, %v754
        %v891 = vmul.f32 %v859, %v755
        %v892 = vmul.f32 %v860, %v756
        %v893 = vmul.f32 %v861, %v757
        %v894 = vmul.f32 %v862, %v758
        %v895 = vmul.f32 %v863, %v759
        %v896 = vmul.f32 %v864, %v760
        %v897 = vmul.f32 %v865, %v761
        %v898 = vmul.f32 %v866, %v762
        %v899 = vmul.f32 %v867, %v763
        %v900 = vmul.f32 %v868, %v764
        %v901 = vmul.f32 %v869, %v765
        %v902 = vmul.f32 %v870, %v766
        %v903 = vmul.f32 %v871, %v767
        %v904 = vmul.f32 %v872, %v768
        %v905 = vmul.f32 %v873, %v769
        %v906 = vmul.f32 %v874, %v770
        %v907 = vmul.f32 %v875, %v771
        %v908 = vmul.f32 %v876, %v772
        %v909 = vmul.f32 %v877, %v773
        %v910 = vmul.f32 %v878, %v774
        %v911 = vmul.f32 %v879, %v775
        %v912 = vmul.f32 %v880, %v776
        %v913 = vmul.f32 %v846, %v846
        %v914 = vrot.slane %v913, 4
        %v915 = vadd.f32 %v913, %v914
        %v916 = vrot.slane %v915, 2
        %v917 = vadd.f32 %v915, %v916
        %v918 = vrot.slane %v917, 1
        %v919 = vadd.f32 %v917, %v918
        %v920 = vmul.f32 %v919, 0.5
        %v921 = vadd.f32 %v881, %v882
        %v922 = vadd.f32 %v921, %v883
        %v923 = vadd.f32 %v922, %v884
        %v924 = vadd.f32 %v923, %v885
        %v925 = vadd.f32 %v924, %v886
        %v926 = vadd.f32 %v925, %v887
        %v927 = vadd.f32 %v926, %v888
        %v928 = vadd.f32 %v927, %v889
        %v929 = vadd.f32 %v928, %v890
        %v930 = vadd.f32 %v929, %v891
        %v931 = vadd.f32 %v930, %v892
        %v932 = vadd.f32 %v931, %v893
        %v933 = vadd.f32 %v932, %v894
        %v934 = vadd.f32 %v933, %v895
        %v935 = vadd.f32 %v934, %v896
        %v936 = vadd.f32 %v935, %v897
        %v937 = vadd.f32 %v936, %v898
        %v938 = vadd.f32 %v937, %v899
        %v939 = vadd.f32 %v938, %v900
        %v940 = vadd.f32 %v939, %v901
        %v941 = vadd.f32 %v940, %v902
        %v942 = vadd.f32 %v941, %v903
        %v943 = vadd.f32 %v942, %v904
        %v944 = vadd.f32 %v943, %v905
        %v945 = vadd.f32 %v944, %v906
        %v946 = vadd.f32 %v945, %v907
        %v947 = vadd.f32 %v946, %v908
        %v948 = vadd.f32 %v947, %v909
        %v949 = vadd.f32 %v948, %v910
        %v950 = vadd.f32 %v949, %v911
        %v951 = vadd.f32 %v950, %v912
        %v952 = vrot.slane %v951, 4
        %v953 = vadd.f32 %v951, %v952
        %v954 = vrot.slane %v953, 2
        %v955 = vadd.f32 %v953, %v954
        %v956 = vrot.slane %v955, 1
        %v957 = vadd.f32 %v955, %v956
        %v958 = vadd.f32 %v920, %v957
        %959 = vst [vmem:[%s323] sm:$0x1] %v958
        %p960 = scmp.lt.s32.totalorder %s24, 1
        %s961 = scalar_select %p960, %s24, 1
        %s962 = scalar_lea.vmem %s6, %s961
        // Predicated region
        $region53: #{forward.1} parent=43 // pred_check
          %p963 = pneg %p183
        $region54: #{forward.1} parent=43 // pred_check_branch
          %965 = sbr.rel (%p963) target = $region56
        $region55: #{forward.1} parent=43 // pred_region
          _
        $region56: #{forward.1} parent=43 // pred_fallthru
          _
      $region44: #{forward.1} parent=5 // pred_fallthru
        _
      %p966 = scmp.le.s32.totalorder 2, %s19
      // Predicated region
      $region57: #{forward.1} parent=5 // pred_check
        %p967 = pneg %p966
      $region58: #{forward.1} parent=5 // pred_check_branch
        %969 = sbr.rel (%p967) target = $region60
      $region59: #{forward.1} parent=5 // pred_region
        %s970 = ssub.s32 %s19, 2
        // Predicated region
        $region61: #{forward.1} parent=59 // pred_check
          %p971 = pneg %p189
        $region62: #{forward.1} parent=59 // pred_check_branch
          %973 = sbr.rel (%p971) target = $region64
        $region63: #{forward.1} parent=59 // pred_region
          %p974 = scmp.lt.s32.totalorder %s25, 1
          %s975 = scalar_select %p974, %s25, 1
          %s976 = scalar_lea.vmem %s6, %s975
        $region64: #{forward.1} parent=59 // pred_fallthru
          _
      $region60: #{forward.1} parent=5 // pred_fallthru
        _
    $region6: #{forward.1} parent=1 // loop_footer
      %s23 = sadd.s32 1, %s19
    $region7: #{forward.1} parent=1 // loop_footer_branch
      %18 = sbr.rel target = $region3
    $region8: #{forward.1} parent=1 // loop_exit
      _
    %977 = vsyncpa [#allocation4], 1
    %s978 = scalar_lea.sflag [#allocation4], 1
    %979 = vsyncpa %s978, 1
    %980 = vsyncpa [#allocation6], 1
    %s981 = scalar_lea.sflag [#allocation6], 1
    %982 = vsyncpa %s981, 1

</llo_original>
